<compile_context>
chip_gen: v5e
topology: v5e:2x2
jax: 0.10.0
libtpu: 0.0.40
codegen_flags: <defaults>
</compile_context>

<pallas_src>
import jax
import jax.numpy as jnp
from jax.experimental import pallas as pl
from jax.experimental.pallas import tpu as pltpu

HIDDEN = 10    # logical hidden width of the PyTorch module
HPAD = 128     # padded hidden width (one full lane-width vreg)


def _round_up(n, m):
    return ((n + m - 1) // m) * m


def _cdiv(a, b):
    return (a + b - 1) // b


def _dis_five_kernel(x_ref, w1_ref, b1_ref, w2_ref, b2_ref, w3_ref, b3_ref,
                     w4_ref, b4_ref, w5_ref, b5_ref, o_ref):
    bf16 = jnp.bfloat16
    x = x_ref[...].astype(bf16)                         # cast hidden under MXU work

    # Layer 1: (TM, dim) @ (dim, HPAD) -> f32 accumulate, bias, ReLU
    h = jnp.dot(x, w1_ref[...], preferred_element_type=jnp.float32)
    h = jnp.maximum(h + b1_ref[...], 0.0).astype(bf16)
    # Layers 2-4: (TM, HPAD) @ (HPAD, HPAD)
    h = jnp.dot(h, w2_ref[...], preferred_element_type=jnp.float32)
    h = jnp.maximum(h + b2_ref[...], 0.0).astype(bf16)
    h = jnp.dot(h, w3_ref[...], preferred_element_type=jnp.float32)
    h = jnp.maximum(h + b3_ref[...], 0.0).astype(bf16)
    h = jnp.dot(h, w4_ref[...], preferred_element_type=jnp.float32)
    h = jnp.maximum(h + b4_ref[...], 0.0).astype(bf16)

    # Layer 5 (HPAD -> 1), lane-dense: contract the hidden axis of h against the
    # w5 row block (only row 0 is populated, rows 1..7 are zero padding so the
    # MXU LHS is a full 8-sublane tile).  Result is (8, TM); keep row 0.
    y8 = jax.lax.dot_general(
        w5_ref[...], h,
        dimension_numbers=(((1,), (1,)), ((), ())),
        preferred_element_type=jnp.float32)             # (8, TM)
    y = y8[0:1, :] + b5_ref[0, 0]                       # scalar bias from SMEM
    o_ref[...] = jax.nn.sigmoid(y).astype(o_ref.dtype)  # (1, TM) lane-dense store


def prepare_params(params, dim):
    """Pad/transpose/cast the 5 (w, b) pairs once; reuse across calls.

    params: 5 tuples (w, b); w stored as (in, out), b as (out,).
    Returns a flat tuple of padded bf16 weights / f32 biases.
    """
    (w1, b1), (w2, b2), (w3, b3), (w4, b4), (w5, b5) = params
    f32, bf16 = jnp.float32, jnp.bfloat16

    def pad_w(w, rows):
        out = jnp.zeros((rows, HPAD), f32)
        out = out.at[: w.shape[0], : w.shape[1]].set(w.astype(f32))
        return out.astype(bf16)

    def pad_b(b):
        return jnp.zeros((1, HPAD), f32).at[0, : b.shape[0]].set(b.astype(f32))

    w1p = pad_w(w1, dim)
    w2p, w3p, w4p = pad_w(w2, HPAD), pad_w(w3, HPAD), pad_w(w4, HPAD)
    b1p, b2p, b3p, b4p = pad_b(b1), pad_b(b2), pad_b(b3), pad_b(b4)
    # w5 as an 8-row block: row 0 holds the weights, rows 1..7 are zero.
    w5p = jnp.zeros((8, HPAD), f32).at[0, : w5.shape[0]].set(
        w5[:, 0].astype(f32)).astype(bf16)
    b5p = jnp.asarray(b5, f32).reshape(1, 1)
    return (w1p, b1p, w2p, b2p, w3p, b3p, w4p, b4p, w5p, b5p)


def dis_five_linear_relu(x, prepared, *, tm_max=4096):
    """x: (B, dim). prepared: output of prepare_params(). Returns (B, 1) f32."""
    w1p, b1p, w2p, b2p, w3p, b3p, w4p, b4p, w5p, b5p = prepared
    B, dim = x.shape
    assert w1p.shape[0] == dim, (w1p.shape, dim)

    # Batch tiling: big tiles amortize the ~0.35us/step pipeline overhead; no
    # wrapper-side zero-pad of x -- rely on Pallas edge-block clipping (garbage
    # rows in the last partial tile are sliced off below).
    TM = min(tm_max, _round_up(B, 8))
    n_tiles = _cdiv(B, TM)
    if n_tiles == 1 and B > 2048:
        # Give v7x's second TensorCore something to do.
        TM = _round_up(_cdiv(B, 2), 128)
        n_tiles = _cdiv(B, TM)
    if n_tiles > 1:
        TM = _round_up(TM, 128)          # lane-dense (1, TM) output blocks
        n_tiles = _cdiv(B, TM)
    out_w = n_tiles * TM

    def resident(shape):
        return pl.BlockSpec(shape, lambda i: (0, 0))     # whole-array, stays in VMEM

    out = pl.pallas_call(
        _dis_five_kernel,
        out_shape=jax.ShapeDtypeStruct((1, out_w), jnp.float32),
        grid=(n_tiles,),
        in_specs=[
            pl.BlockSpec((TM, dim), lambda i: (i, 0)),          # x: tiled over batch
            resident((dim, HPAD)),                              # w1 (bf16)
            resident((1, HPAD)),                                # b1
            resident((HPAD, HPAD)),                             # w2
            resident((1, HPAD)),                                # b2
            resident((HPAD, HPAD)),                             # w3
            resident((1, HPAD)),                                # b3
            resident((HPAD, HPAD)),                             # w4
            resident((1, HPAD)),                                # b4
            resident((8, HPAD)),                                # w5 (8-row block)
            pl.BlockSpec(memory_space=pltpu.MemorySpace.SMEM),  # b5 scalar in SMEM
        ],
        out_specs=pl.BlockSpec((1, TM), lambda i: (0, i)),      # lane-dense row
        compiler_params=pltpu.CompilerParams(
            dimension_semantics=("parallel",)),                 # 2x on v7x dual TC
    )(x, w1p, b1p, w2p, b2p, w3p, b3p, w4p, b4p, w5p, b5p)

    return out[0, :B].reshape(B, 1)


def init_params(key, dim):
    """Mimic nn.Linear's U(-1/sqrt(fan_in), 1/sqrt(fan_in)) init; w stored (in, out)."""
    sizes = [(dim, HIDDEN), (HIDDEN, HIDDEN), (HIDDEN, HIDDEN),
             (HIDDEN, HIDDEN), (HIDDEN, 1)]
    keys = jax.random.split(key, 2 * len(sizes))
    params = []
    for idx, (fan_in, fan_out) in enumerate(sizes):
        bound = 1.0 / jnp.sqrt(float(fan_in))
        w = jax.random.uniform(keys[2 * idx], (fan_in, fan_out), jnp.float32,
                               -bound, bound)
        b = jax.random.uniform(keys[2 * idx + 1], (fan_out,), jnp.float32,
                               -bound, bound)
        params.append((w, b))
    return params


def reference(x, params):
    h = x
    for w, b in params[:-1]:
        h = jnp.maximum(h @ w + b, 0.0)
    w5, b5 = params[-1]
    return jax.nn.sigmoid(h @ w5 + b5)


if __name__ == "__main__":
    dim = 32
    batch = 16

    key = jax.random.PRNGKey(0)
    kx, kp = jax.random.split(key)
    x = jax.random.normal(kx, (batch, dim), jnp.float32)
    params = init_params(kp, dim)

    prepared = prepare_params(params, dim)               # pad/cast once, reuse
    y = dis_five_linear_relu(x, prepared)
    y = jax.block_until_ready(y)

    y_ref = reference(x, params)                          # full-f32 reference
    assert y.shape == (batch, 1), y.shape
    # bf16 matmul operands -> relax from 1e-5 to bf16-level tolerance.
    assert jnp.allclose(y, y_ref, atol=2e-2, rtol=2e-2), (
        float(jnp.max(jnp.abs(y - y_ref))))

    print("KERNEL_OK")
</pallas_src>

<mosaic_0001>
module attributes {stable_mosaic.version = 11 : i64} {
  func.func @_dis_five_kernel(%arg0: i32, %arg1: memref<16x32xf32, #tpu.memory_space<vmem>>, %arg2: memref<32x128xbf16, #tpu.memory_space<vmem>>, %arg3: memref<1x128xf32, #tpu.memory_space<vmem>>, %arg4: memref<128x128xbf16, #tpu.memory_space<vmem>>, %arg5: memref<1x128xf32, #tpu.memory_space<vmem>>, %arg6: memref<128x128xbf16, #tpu.memory_space<vmem>>, %arg7: memref<1x128xf32, #tpu.memory_space<vmem>>, %arg8: memref<128x128xbf16, #tpu.memory_space<vmem>>, %arg9: memref<1x128xf32, #tpu.memory_space<vmem>>, %arg10: memref<8x128xbf16, #tpu.memory_space<vmem>>, %arg11: memref<1x1xf32, #tpu.memory_space<smem>>, %arg12: memref<1x16xf32, #tpu.memory_space<vmem>>) attributes {dimension_semantics = [#tpu.dimension_semantics<parallel>], iteration_bounds = array<i64: 1>, scalar_prefetch = 0 : i64, scratch_operands = 0 : i64, tpu.core_type = #tpu.core_type<tc>, window_params = [{transform_indices = @transform_0, window_bounds = array<i64: 16, 32>}, {pipeline_mode = #tpu.pipeline_mode<synchronous>, transform_indices = @transform_1, window_bounds = array<i64: 32, 128>}, {pipeline_mode = #tpu.pipeline_mode<synchronous>, transform_indices = @transform_2, window_bounds = array<i64: 1, 128>}, {pipeline_mode = #tpu.pipeline_mode<synchronous>, transform_indices = @transform_3, window_bounds = array<i64: 128, 128>}, {pipeline_mode = #tpu.pipeline_mode<synchronous>, transform_indices = @transform_4, window_bounds = array<i64: 1, 128>}, {pipeline_mode = #tpu.pipeline_mode<synchronous>, transform_indices = @transform_5, window_bounds = array<i64: 128, 128>}, {pipeline_mode = #tpu.pipeline_mode<synchronous>, transform_indices = @transform_6, window_bounds = array<i64: 1, 128>}, {pipeline_mode = #tpu.pipeline_mode<synchronous>, transform_indices = @transform_7, window_bounds = array<i64: 128, 128>}, {pipeline_mode = #tpu.pipeline_mode<synchronous>, transform_indices = @transform_8, window_bounds = array<i64: 1, 128>}, {pipeline_mode = #tpu.pipeline_mode<synchronous>, transform_indices = @transform_9, window_bounds = array<i64: 8, 128>}, {transform_indices = @transform_10, window_bounds = array<i64: 1, 1>}, {transform_indices = @transform_11, window_bounds = array<i64: 1, 16>}]} {
    %c0 = arith.constant 0 : index
    %c0_0 = arith.constant 0 : index
    %0 = vector.load %arg1[%c0, %c0_0] : memref<16x32xf32, #tpu.memory_space<vmem>>, vector<16x32xf32>
    %1 = arith.truncf %0 : vector<16x32xf32> to vector<16x32xbf16>
    %c0_1 = arith.constant 0 : index
    %c0_2 = arith.constant 0 : index
    %2 = vector.load %arg2[%c0_1, %c0_2] : memref<32x128xbf16, #tpu.memory_space<vmem>>, vector<32x128xbf16>
    %cst = arith.constant dense<0.000000e+00> : vector<16x128xf32>
    %3 = tpu.matmul %1, %2, %cst {dimension_numbers = #tpu.dot_dimension_numbers<[1], [0], [0], [1], [0, 0, 1, 1], [], []>} : vector<16x32xbf16>, vector<32x128xbf16>, vector<16x128xf32> -> vector<16x128xf32>
    %c0_3 = arith.constant 0 : index
    %c0_4 = arith.constant 0 : index
    %4 = vector.load %arg3[%c0_3, %c0_4] : memref<1x128xf32, #tpu.memory_space<vmem>>, vector<1x128xf32>
    %5 = vector.broadcast %4 : vector<1x128xf32> to vector<16x128xf32>
    %6 = arith.addf %3, %5 : vector<16x128xf32>
    %cst_5 = arith.constant 0.000000e+00 : f32
    %7 = vector.broadcast %cst_5 : f32 to vector<16x128xf32>
    %8 = arith.maximumf %6, %7 : vector<16x128xf32>
    %9 = arith.truncf %8 : vector<16x128xf32> to vector<16x128xbf16>
    %c0_6 = arith.constant 0 : index
    %c0_7 = arith.constant 0 : index
    %10 = vector.load %arg4[%c0_6, %c0_7] : memref<128x128xbf16, #tpu.memory_space<vmem>>, vector<128x128xbf16>
    %cst_8 = arith.constant dense<0.000000e+00> : vector<16x128xf32>
    %11 = tpu.matmul %9, %10, %cst_8 {dimension_numbers = #tpu.dot_dimension_numbers<[1], [0], [0], [1], [0, 0, 1, 1], [], []>} : vector<16x128xbf16>, vector<128x128xbf16>, vector<16x128xf32> -> vector<16x128xf32>
    %c0_9 = arith.constant 0 : index
    %c0_10 = arith.constant 0 : index
    %12 = vector.load %arg5[%c0_9, %c0_10] : memref<1x128xf32, #tpu.memory_space<vmem>>, vector<1x128xf32>
    %13 = vector.broadcast %12 : vector<1x128xf32> to vector<16x128xf32>
    %14 = arith.addf %11, %13 : vector<16x128xf32>
    %cst_11 = arith.constant 0.000000e+00 : f32
    %15 = vector.broadcast %cst_11 : f32 to vector<16x128xf32>
    %16 = arith.maximumf %14, %15 : vector<16x128xf32>
    %17 = arith.truncf %16 : vector<16x128xf32> to vector<16x128xbf16>
    %c0_12 = arith.constant 0 : index
    %c0_13 = arith.constant 0 : index
    %18 = vector.load %arg6[%c0_12, %c0_13] : memref<128x128xbf16, #tpu.memory_space<vmem>>, vector<128x128xbf16>
    %cst_14 = arith.constant dense<0.000000e+00> : vector<16x128xf32>
    %19 = tpu.matmul %17, %18, %cst_14 {dimension_numbers = #tpu.dot_dimension_numbers<[1], [0], [0], [1], [0, 0, 1, 1], [], []>} : vector<16x128xbf16>, vector<128x128xbf16>, vector<16x128xf32> -> vector<16x128xf32>
    %c0_15 = arith.constant 0 : index
    %c0_16 = arith.constant 0 : index
    %20 = vector.load %arg7[%c0_15, %c0_16] : memref<1x128xf32, #tpu.memory_space<vmem>>, vector<1x128xf32>
    %21 = vector.broadcast %20 : vector<1x128xf32> to vector<16x128xf32>
    %22 = arith.addf %19, %21 : vector<16x128xf32>
    %cst_17 = arith.constant 0.000000e+00 : f32
    %23 = vector.broadcast %cst_17 : f32 to vector<16x128xf32>
    %24 = arith.maximumf %22, %23 : vector<16x128xf32>
    %25 = arith.truncf %24 : vector<16x128xf32> to vector<16x128xbf16>
    %c0_18 = arith.constant 0 : index
    %c0_19 = arith.constant 0 : index
    %26 = vector.load %arg8[%c0_18, %c0_19] : memref<128x128xbf16, #tpu.memory_space<vmem>>, vector<128x128xbf16>
    %cst_20 = arith.constant dense<0.000000e+00> : vector<16x128xf32>
    %27 = tpu.matmul %25, %26, %cst_20 {dimension_numbers = #tpu.dot_dimension_numbers<[1], [0], [0], [1], [0, 0, 1, 1], [], []>} : vector<16x128xbf16>, vector<128x128xbf16>, vector<16x128xf32> -> vector<16x128xf32>
    %c0_21 = arith.constant 0 : index
    %c0_22 = arith.constant 0 : index
    %28 = vector.load %arg9[%c0_21, %c0_22] : memref<1x128xf32, #tpu.memory_space<vmem>>, vector<1x128xf32>
    %29 = vector.broadcast %28 : vector<1x128xf32> to vector<16x128xf32>
    %30 = arith.addf %27, %29 : vector<16x128xf32>
    %cst_23 = arith.constant 0.000000e+00 : f32
    %31 = vector.broadcast %cst_23 : f32 to vector<16x128xf32>
    %32 = arith.maximumf %30, %31 : vector<16x128xf32>
    %33 = arith.truncf %32 : vector<16x128xf32> to vector<16x128xbf16>
    %c0_24 = arith.constant 0 : index
    %c0_25 = arith.constant 0 : index
    %34 = vector.load %arg10[%c0_24, %c0_25] : memref<8x128xbf16, #tpu.memory_space<vmem>>, vector<8x128xbf16>
    %cst_26 = arith.constant dense<0.000000e+00> : vector<8x16xf32>
    %35 = tpu.matmul %34, %33, %cst_26 {dimension_numbers = #tpu.dot_dimension_numbers<[1], [1], [0], [0], [0, 0, 1, 0], [], []>} : vector<8x128xbf16>, vector<16x128xbf16>, vector<8x16xf32> -> vector<8x16xf32>
    %36 = vector.extract_strided_slice %35 {offsets = [0, 0], sizes = [1, 16], strides = [1, 1]} : vector<8x16xf32> to vector<1x16xf32>
    %c0_27 = arith.constant 0 : index
    %c0_28 = arith.constant 0 : index
    %37 = memref.load %arg11[%c0_27, %c0_28] : memref<1x1xf32, #tpu.memory_space<smem>>
    %38 = vector.broadcast %37 : f32 to vector<1x16xf32>
    %39 = arith.addf %36, %38 : vector<1x16xf32>
    %40 = arith.negf %39 : vector<1x16xf32>
    %41 = math.exp %40 : vector<1x16xf32>
    %cst_29 = arith.constant 1.000000e+00 : f32
    %42 = vector.broadcast %cst_29 : f32 to vector<1x16xf32>
    %43 = arith.addf %42, %41 : vector<1x16xf32>
    %44 = arith.divf %42, %43 : vector<1x16xf32>
    %c0_30 = arith.constant 0 : index
    %c0_31 = arith.constant 0 : index
    %45 = vector.load %arg12[%c0_30, %c0_31] : memref<1x16xf32, #tpu.memory_space<vmem>>, vector<1x16xf32>
    tpu.vector_store %arg12[%c0_30, %c0_31], %44 {strides = array<i32>} : memref<1x16xf32, #tpu.memory_space<vmem>>, vector<1x16xf32>,
    return
  }
  func.func @transform_0(%arg0: i32) -> (i32, i32) {
    %c0_i32 = arith.constant 0 : i32
    %c0_i32_0 = arith.constant 0 : i32
    return %arg0, %c0_i32 : i32, i32
  }
  func.func @transform_1(%arg0: i32) -> (i32, i32) {
    %c0_i32 = arith.constant 0 : i32
    %c0_i32_0 = arith.constant 0 : i32
    %c0_i32_1 = arith.constant 0 : i32
    return %c0_i32, %c0_i32_0 : i32, i32
  }
  func.func @transform_2(%arg0: i32) -> (i32, i32) {
    %c0_i32 = arith.constant 0 : i32
    %c0_i32_0 = arith.constant 0 : i32
    %c0_i32_1 = arith.constant 0 : i32
    return %c0_i32, %c0_i32_0 : i32, i32
  }
  func.func @transform_3(%arg0: i32) -> (i32, i32) {
    %c0_i32 = arith.constant 0 : i32
    %c0_i32_0 = arith.constant 0 : i32
    %c0_i32_1 = arith.constant 0 : i32
    return %c0_i32, %c0_i32_0 : i32, i32
  }
  func.func @transform_4(%arg0: i32) -> (i32, i32) {
    %c0_i32 = arith.constant 0 : i32
    %c0_i32_0 = arith.constant 0 : i32
    %c0_i32_1 = arith.constant 0 : i32
    return %c0_i32, %c0_i32_0 : i32, i32
  }
  func.func @transform_5(%arg0: i32) -> (i32, i32) {
    %c0_i32 = arith.constant 0 : i32
    %c0_i32_0 = arith.constant 0 : i32
    %c0_i32_1 = arith.constant 0 : i32
    return %c0_i32, %c0_i32_0 : i32, i32
  }
  func.func @transform_6(%arg0: i32) -> (i32, i32) {
    %c0_i32 = arith.constant 0 : i32
    %c0_i32_0 = arith.constant 0 : i32
    %c0_i32_1 = arith.constant 0 : i32
    return %c0_i32, %c0_i32_0 : i32, i32
  }
  func.func @transform_7(%arg0: i32) -> (i32, i32) {
    %c0_i32 = arith.constant 0 : i32
    %c0_i32_0 = arith.constant 0 : i32
    %c0_i32_1 = arith.constant 0 : i32
    return %c0_i32, %c0_i32_0 : i32, i32
  }
  func.func @transform_8(%arg0: i32) -> (i32, i32) {
    %c0_i32 = arith.constant 0 : i32
    %c0_i32_0 = arith.constant 0 : i32
    %c0_i32_1 = arith.constant 0 : i32
    return %c0_i32, %c0_i32_0 : i32, i32
  }
  func.func @transform_9(%arg0: i32) -> (i32, i32) {
    %c0_i32 = arith.constant 0 : i32
    %c0_i32_0 = arith.constant 0 : i32
    %c0_i32_1 = arith.constant 0 : i32
    return %c0_i32, %c0_i32_0 : i32, i32
  }
  func.func @transform_10(%arg0: i32) -> (i32, i32) {
    %c0_i32 = arith.constant 0 : i32
    %c0_i32_0 = arith.constant 0 : i32
    %c0_i32_1 = arith.constant 0 : i32
    return %c0_i32, %c0_i32_0 : i32, i32
  }
  func.func @transform_11(%arg0: i32) -> (i32, i32) {
    %c0_i32 = arith.constant 0 : i32
    %c0_i32_0 = arith.constant 0 : i32
    return %c0_i32, %arg0 : i32, i32
  }
}

</mosaic_0001>

<llo_original>
// kernel: tpu_custom_call.1
$region0: #{tpu_custom_call.1}
  #allocation0 [shape = 'u32[]', space=smem, size = 0x4, offset = 0x4, fixed_abs, tag = 'smem constant byte address 0x4 - core index']
  #allocation1 [shape = 'u32[72,128]{1,0:T(1,128)}', space=vmem, size = 0x9000, scoped, tag = 'internal scratch']
  #allocation2 [shape = 'f32[1,1]{1,0:T(1,128)S(6)}', space=smem, size = 0x200, scoped, tag = 'scoped memory for tpu_custom_call.1']
  %s0 = inlined_call_operand.hbm [shape: f32[16,32], index: 0, kind: input, shape index: {}]
  %s1 = inlined_call_operand.hbm [shape: bf16[32,128], index: 1, kind: input, shape index: {}]
  %s2 = inlined_call_operand.vmem [shape: f32[1,128], index: 2, kind: input, shape index: {}]
  %s3 = inlined_call_operand.hbm [shape: bf16[128,128], index: 3, kind: input, shape index: {}]
  %s4 = inlined_call_operand.vmem [shape: f32[1,128], index: 4, kind: input, shape index: {}]
  %s5 = inlined_call_operand.hbm [shape: bf16[128,128], index: 5, kind: input, shape index: {}]
  %s6 = inlined_call_operand.vmem [shape: f32[1,128], index: 6, kind: input, shape index: {}]
  %s7 = inlined_call_operand.hbm [shape: bf16[128,128], index: 7, kind: input, shape index: {}]
  %s8 = inlined_call_operand.vmem [shape: f32[1,128], index: 8, kind: input, shape index: {}]
  %s9 = inlined_call_operand.vmem [shape: bf16[8,128], index: 9, kind: input, shape index: {}]
  %s10 = inlined_call_operand.<no memory space> [shape: f32[1,1], index: 10, kind: input, shape index: {}]
  %s11 = inlined_call_operand.hbm [shape: f32[1,16], index: 11, kind: output, shape index: {}]
  %s12 = sld [smem:[#allocation0]]
  $region74: #{tpu_custom_call.1} parent=0
    _
  %s14 = ssub.s32 1, %s12
  %s15 = scalar_select 0, %s14, %s12
  %16 = sst [smem:[#allocation2]] %s10
  $region1: #{tpu_custom_call.1} parent=0
    #allocation3 [shape = 'u8[8192]{0}', space=vmem, size = 0x2000, scoped, tag = 'input window, operand 0, single buffered']
    #allocation4 [shape = 's32[1]{0}', space=sflag, size = 0x4, scoped, tag = 'scoped memory for tpu_custom_call.1']
    #allocation5 [shape = 's32[1]{0}', space=sflag, size = 0x4, scoped, tag = 'scoped memory for tpu_custom_call.1']
    #allocation6 [shape = 'u8[8192]{0}', space=vmem, size = 0x2000, scoped, tag = 'input window, operand 1, single buffered']
    #allocation7 [shape = 's32[1]{0}', space=sflag, size = 0x4, scoped, tag = 'scoped memory for tpu_custom_call.1']
    #allocation8 [shape = 'u8[32768]{0}', space=vmem, size = 0x8000, scoped, tag = 'input window, operand 3, single buffered']
    #allocation9 [shape = 'u8[32768]{0}', space=vmem, size = 0x8000, scoped, tag = 'input window, operand 5, single buffered']
    #allocation10 [shape = 's32[1]{0}', space=sflag, size = 0x4, scoped, tag = 'scoped memory for tpu_custom_call.1']
    #allocation11 [shape = 'u8[32768]{0}', space=vmem, size = 0x8000, scoped, tag = 'input window, operand 7, single buffered']
    #allocation12 [shape = 'u8[512]{0}', space=vmem, size = 0x400, scoped, tag = 'output window, operand 0, single buffered']
    %17 = vsyncpa [#allocation4], 0
    %18 = vsyncpa [#allocation7], 0
    %19 = vsyncpa [#allocation10], 0
    %20 = vsyncpa [#allocation5], 0
    // Predicated region
    $region2: #{tpu_custom_call.1} parent=1 // pred_check
      _
    $region3: #{tpu_custom_call.1} parent=1 // pred_check_branch
      %22 = sbr.rel (0) target = $region5
    $region4: #{tpu_custom_call.1} parent=1 // pred_region
      %24 = vsyncadd [#allocation4], 0
      %s25 = sshll.u32 %s0, 4
      %s26 = int_to_ptr.hbm [resolvable:$true] %s25
      %s27 = sshll.u32 [#allocation3], 4
      %s28 = int_to_ptr.vmem [resolvable:$true] %s27
      %33 = dma.hbm_to_vmem [thread:$0]  %s26, 256, %s28, [#allocation4], 128, 128, 8
    $region5: #{tpu_custom_call.1} parent=1 // pred_fallthru
      _
    // Predicated region
    $region6: #{tpu_custom_call.1} parent=1 // pred_check
      _
    $region7: #{tpu_custom_call.1} parent=1 // pred_check_branch
      %35 = sbr.rel (0) target = $region9
    $region8: #{tpu_custom_call.1} parent=1 // pred_region
      %37 = vsyncadd [#allocation7], 0
      %s38 = sshll.u32 %s1, 4
      %s39 = int_to_ptr.hbm [resolvable:$true] %s38
      %s40 = sshll.u32 [#allocation6], 4
      %s41 = int_to_ptr.vmem [resolvable:$true] %s40
      %46 = dma.hbm_to_vmem [thread:$0]  %s39, 256, %s41, [#allocation7], 64, 64, 4
    $region9: #{tpu_custom_call.1} parent=1 // pred_fallthru
      _
    // Predicated region
    $region10: #{tpu_custom_call.1} parent=1 // pred_check
      _
    $region11: #{tpu_custom_call.1} parent=1 // pred_check_branch
      %48 = sbr.rel (0) target = $region13
    $region12: #{tpu_custom_call.1} parent=1 // pred_region
      _
    $region13: #{tpu_custom_call.1} parent=1 // pred_fallthru
      _
    // Predicated region
    $region14: #{tpu_custom_call.1} parent=1 // pred_check
      _
    $region15: #{tpu_custom_call.1} parent=1 // pred_check_branch
      %50 = sbr.rel (0) target = $region17
    $region16: #{tpu_custom_call.1} parent=1 // pred_region
      %52 = vsyncadd [#allocation7], 0
      %s53 = sshll.u32 %s3, 4
      %s54 = int_to_ptr.hbm [resolvable:$true] %s53
      %s55 = sshll.u32 [#allocation8], 4
      %s56 = int_to_ptr.vmem [resolvable:$true] %s55
      %61 = dma.hbm_to_vmem [thread:$0]  %s54, 1024, %s56, [#allocation7], 64, 64, 4
    $region17: #{tpu_custom_call.1} parent=1 // pred_fallthru
      _
    // Predicated region
    $region18: #{tpu_custom_call.1} parent=1 // pred_check
      _
    $region19: #{tpu_custom_call.1} parent=1 // pred_check_branch
      %63 = sbr.rel (0) target = $region21
    $region20: #{tpu_custom_call.1} parent=1 // pred_region
      _
    $region21: #{tpu_custom_call.1} parent=1 // pred_fallthru
      _
    // Predicated region
    $region22: #{tpu_custom_call.1} parent=1 // pred_check
      _
    $region23: #{tpu_custom_call.1} parent=1 // pred_check_branch
      %65 = sbr.rel (0) target = $region25
    $region24: #{tpu_custom_call.1} parent=1 // pred_region
      %67 = vsyncadd [#allocation10], 0
      %s68 = sshll.u32 %s5, 4
      %s69 = int_to_ptr.hbm [resolvable:$true] %s68
      %s70 = sshll.u32 [#allocation9], 4
      %s71 = int_to_ptr.vmem [resolvable:$true] %s70
      %76 = dma.hbm_to_vmem [thread:$0]  %s69, 1024, %s71, [#allocation10], 64, 64, 4
    $region25: #{tpu_custom_call.1} parent=1 // pred_fallthru
      _
    // Predicated region
    $region26: #{tpu_custom_call.1} parent=1 // pred_check
      _
    $region27: #{tpu_custom_call.1} parent=1 // pred_check_branch
      %78 = sbr.rel (0) target = $region29
    $region28: #{tpu_custom_call.1} parent=1 // pred_region
      _
    $region29: #{tpu_custom_call.1} parent=1 // pred_fallthru
      _
    // Predicated region
    $region30: #{tpu_custom_call.1} parent=1 // pred_check
      _
    $region31: #{tpu_custom_call.1} parent=1 // pred_check_branch
      %80 = sbr.rel (0) target = $region33
    $region32: #{tpu_custom_call.1} parent=1 // pred_region
      %82 = vsyncadd [#allocation10], 0
      %s83 = sshll.u32 %s7, 4
      %s84 = int_to_ptr.hbm [resolvable:$true] %s83
      %s85 = sshll.u32 [#allocation11], 4
      %s86 = int_to_ptr.vmem [resolvable:$true] %s85
      %91 = dma.hbm_to_vmem [thread:$0]  %s84, 1024, %s86, [#allocation10], 64, 64, 4
    $region33: #{tpu_custom_call.1} parent=1 // pred_fallthru
      _
    // Predicated region
    $region34: #{tpu_custom_call.1} parent=1 // pred_check
      _
    $region35: #{tpu_custom_call.1} parent=1 // pred_check_branch
      %93 = sbr.rel (0) target = $region37
    $region36: #{tpu_custom_call.1} parent=1 // pred_region
      _
    $region37: #{tpu_custom_call.1} parent=1 // pred_fallthru
      _
    // Predicated region
    $region38: #{tpu_custom_call.1} parent=1 // pred_check
      _
    $region39: #{tpu_custom_call.1} parent=1 // pred_check_branch
      %95 = sbr.rel (0) target = $region41
    $region40: #{tpu_custom_call.1} parent=1 // pred_region
      _
    $region41: #{tpu_custom_call.1} parent=1 // pred_fallthru
      _
    // Predicated region
    $region42: #{tpu_custom_call.1} parent=1 // pred_check
      _
    $region43: #{tpu_custom_call.1} parent=1 // pred_check_branch
      %97 = sbr.rel (0) target = $region45
    $region44: #{tpu_custom_call.1} parent=1 // pred_region
      _
    $region45: #{tpu_custom_call.1} parent=1 // pred_fallthru
      _
    // Predicated region
    $region46: #{tpu_custom_call.1} parent=1 // pred_check
      _
    $region47: #{tpu_custom_call.1} parent=1 // pred_check_branch
      %99 = sbr.rel (0) target = $region49
    $region48: #{tpu_custom_call.1} parent=1 // pred_region
      %101 = dma.done [#allocation4], 256
    $region49: #{tpu_custom_call.1} parent=1 // pred_fallthru
      _
    // Predicated region
    $region50: #{tpu_custom_call.1} parent=1 // pred_check
      _
    $region51: #{tpu_custom_call.1} parent=1 // pred_check_branch
      %103 = sbr.rel (0) target = $region53
    $region52: #{tpu_custom_call.1} parent=1 // pred_region
      %105 = dma.done [#allocation7], 256
    $region53: #{tpu_custom_call.1} parent=1 // pred_fallthru
      _
    // Predicated region
    $region54: #{tpu_custom_call.1} parent=1 // pred_check
      _
    $region55: #{tpu_custom_call.1} parent=1 // pred_check_branch
      %107 = sbr.rel (0) target = $region57
    $region56: #{tpu_custom_call.1} parent=1 // pred_region
      %109 = dma.done [#allocation7], 1024
    $region57: #{tpu_custom_call.1} parent=1 // pred_fallthru
      _
    // Predicated region
    $region58: #{tpu_custom_call.1} parent=1 // pred_check
      _
    $region59: #{tpu_custom_call.1} parent=1 // pred_check_branch
      %111 = sbr.rel (0) target = $region61
    $region60: #{tpu_custom_call.1} parent=1 // pred_region
      %113 = dma.done [#allocation10], 1024
    $region61: #{tpu_custom_call.1} parent=1 // pred_fallthru
      _
    // Predicated region
    $region62: #{tpu_custom_call.1} parent=1 // pred_check
      _
    $region63: #{tpu_custom_call.1} parent=1 // pred_check_branch
      %115 = sbr.rel (0) target = $region65
    $region64: #{tpu_custom_call.1} parent=1 // pred_region
      %117 = dma.done [#allocation10], 1024
    $region65: #{tpu_custom_call.1} parent=1 // pred_fallthru
      _
    %v119 = vld [vmem:[#allocation3] sm:$0xff]
    %v120 = vld [vmem:[#allocation3 + $0x8] sm:$0xff]
    %v121 = vpack.c.bf16 %v120, %v119
    %v122 = vld [vmem:[#allocation6] sm:$0xf]
    %v123 = vld [vmem:[#allocation6 + $0x4] sm:$0xf]
    %v124 = vld [vmem:[#allocation6 + $0x8] sm:$0xf]
    %v125 = vld [vmem:[#allocation6 + $0xc] sm:$0xf]
    %v126 = vld [vmem:[%s2] sm:$0x1]
    %v128 = vperm.slane %v126, 0
    %v134 = vunpack.c.l.b16 %v122
    %v135 = vunpack.c.l.b16 %v123
    %v136 = vunpack.c.l.b16 %v124
    %v137 = vunpack.c.l.b16 %v125
    %v138 = vpack.c.b16 %v135, %v134
    %v139 = vpack.c.b16 %v137, %v136
    %vm142 = vcmask 261120
    %v144 = vsel %vm142, %v121, 0
    %146 = vmatpush.bf16.msra.mxu0 0
    %147 = vmatpush.bf16.msra.mxu0 0
    %148 = vmatpush.bf16.msra.mxu0 0
    %149 = vmatpush.bf16.msra.mxu0 0
    %150 = vmatpush.bf16.msra.mxu0 0
    %151 = vmatpush.bf16.msra.mxu0 0
    %152 = vmatpush.bf16.msra.mxu0 %v139
    %153 = vmatpush.bf16.msra.mxu0 %v138
    %154 = vmatmul.bf16.gmra.mxu0 %v144
    %v155 = vpop.f32.mrf.mxu0
    %v156 = vadd.f32 %v128, %v155
    %v157 = vpop.f32.mrf.mxu0
    %v158 = vadd.f32 %v128, %v157
    %159 = vdwg.mxu0
    %v160 = vmax.f32 %v156, 0.0
    %v161 = vmax.f32 %v158, 0.0
    %v162 = vpack.c.bf16 %v161, %v160
    %v163 = vld [vmem:[#allocation8] sm:$0xf]
    %v164 = vld [vmem:[#allocation8 + $0x4] sm:$0xf]
    %v165 = vld [vmem:[#allocation8 + $0x8] sm:$0xf]
    %v166 = vld [vmem:[#allocation8 + $0xc] sm:$0xf]
    %v167 = vld [vmem:[#allocation8 + $0x10] sm:$0xf]
    %v168 = vld [vmem:[#allocation8 + $0x14] sm:$0xf]
    %v169 = vld [vmem:[#allocation8 + $0x18] sm:$0xf]
    %v170 = vld [vmem:[#allocation8 + $0x1c] sm:$0xf]
    %v171 = vld [vmem:[#allocation8 + $0x20] sm:$0xf]
    %v172 = vld [vmem:[#allocation8 + $0x24] sm:$0xf]
    %v173 = vld [vmem:[#allocation8 + $0x28] sm:$0xf]
    %v174 = vld [vmem:[#allocation8 + $0x2c] sm:$0xf]
    %v175 = vld [vmem:[#allocation8 + $0x30] sm:$0xf]
    %v176 = vld [vmem:[#allocation8 + $0x34] sm:$0xf]
    %v177 = vld [vmem:[#allocation8 + $0x38] sm:$0xf]
    %v178 = vld [vmem:[#allocation8 + $0x3c] sm:$0xf]
    %v179 = vld [vmem:[%s4] sm:$0x1]
    %v181 = vperm.slane %v179, 0
    %v199 = vunpack.c.l.b16 %v163
    %v200 = vunpack.c.l.b16 %v164
    %v201 = vunpack.c.l.b16 %v165
    %v202 = vunpack.c.l.b16 %v166
    %v203 = vunpack.c.l.b16 %v167
    %v204 = vunpack.c.l.b16 %v168
    %v205 = vunpack.c.l.b16 %v169
    %v206 = vunpack.c.l.b16 %v170
    %v207 = vunpack.c.l.b16 %v171
    %v208 = vunpack.c.l.b16 %v172
    %v209 = vunpack.c.l.b16 %v173
    %v210 = vunpack.c.l.b16 %v174
    %v211 = vunpack.c.l.b16 %v175
    %v212 = vunpack.c.l.b16 %v176
    %v213 = vunpack.c.l.b16 %v177
    %v214 = vunpack.c.l.b16 %v178
    %v215 = vpack.c.b16 %v200, %v199
    %v216 = vpack.c.b16 %v202, %v201
    %v217 = vpack.c.b16 %v204, %v203
    %v218 = vpack.c.b16 %v206, %v205
    %v219 = vpack.c.b16 %v208, %v207
    %v220 = vpack.c.b16 %v210, %v209
    %v221 = vpack.c.b16 %v212, %v211
    %v222 = vpack.c.b16 %v214, %v213
    %231 = vmatpush.bf16.msra.mxu0 %v222
    %232 = vmatpush.bf16.msra.mxu0 %v221
    %233 = vmatpush.bf16.msra.mxu0 %v220
    %234 = vmatpush.bf16.msra.mxu0 %v219
    %235 = vmatpush.bf16.msra.mxu0 %v218
    %236 = vmatpush.bf16.msra.mxu0 %v217
    %237 = vmatpush.bf16.msra.mxu0 %v216
    %238 = vmatpush.bf16.msra.mxu0 %v215
    %239 = vmatmul.bf16.gmra.mxu0 %v162
    %v240 = vpop.f32.mrf.mxu0
    %v241 = vadd.f32 %v181, %v240
    %v242 = vpop.f32.mrf.mxu0
    %v243 = vadd.f32 %v181, %v242
    %244 = vdwg.mxu0
    %v245 = vmax.f32 %v241, 0.0
    %v246 = vmax.f32 %v243, 0.0
    %v247 = vpack.c.bf16 %v246, %v245
    %v248 = vld [vmem:[#allocation9] sm:$0xf]
    %v249 = vld [vmem:[#allocation9 + $0x4] sm:$0xf]
    %v250 = vld [vmem:[#allocation9 + $0x8] sm:$0xf]
    %v251 = vld [vmem:[#allocation9 + $0xc] sm:$0xf]
    %v252 = vld [vmem:[#allocation9 + $0x10] sm:$0xf]
    %v253 = vld [vmem:[#allocation9 + $0x14] sm:$0xf]
    %v254 = vld [vmem:[#allocation9 + $0x18] sm:$0xf]
    %v255 = vld [vmem:[#allocation9 + $0x1c] sm:$0xf]
    %v256 = vld [vmem:[#allocation9 + $0x20] sm:$0xf]
    %v257 = vld [vmem:[#allocation9 + $0x24] sm:$0xf]
    %v258 = vld [vmem:[#allocation9 + $0x28] sm:$0xf]
    %v259 = vld [vmem:[#allocation9 + $0x2c] sm:$0xf]
    %v260 = vld [vmem:[#allocation9 + $0x30] sm:$0xf]
    %v261 = vld [vmem:[#allocation9 + $0x34] sm:$0xf]
    %v262 = vld [vmem:[#allocation9 + $0x38] sm:$0xf]
    %v263 = vld [vmem:[#allocation9 + $0x3c] sm:$0xf]
    %v264 = vld [vmem:[%s6] sm:$0x1]
    %v266 = vperm.slane %v264, 0
    %v284 = vunpack.c.l.b16 %v248
    %v285 = vunpack.c.l.b16 %v249
    %v286 = vunpack.c.l.b16 %v250
    %v287 = vunpack.c.l.b16 %v251
    %v288 = vunpack.c.l.b16 %v252
    %v289 = vunpack.c.l.b16 %v253
    %v290 = vunpack.c.l.b16 %v254
    %v291 = vunpack.c.l.b16 %v255
    %v292 = vunpack.c.l.b16 %v256
    %v293 = vunpack.c.l.b16 %v257
    %v294 = vunpack.c.l.b16 %v258
    %v295 = vunpack.c.l.b16 %v259
    %v296 = vunpack.c.l.b16 %v260
    %v297 = vunpack.c.l.b16 %v261
    %v298 = vunpack.c.l.b16 %v262
    %v299 = vunpack.c.l.b16 %v263
    %v300 = vpack.c.b16 %v285, %v284
    %v301 = vpack.c.b16 %v287, %v286
    %v302 = vpack.c.b16 %v289, %v288
    %v303 = vpack.c.b16 %v291, %v290
    %v304 = vpack.c.b16 %v293, %v292
    %v305 = vpack.c.b16 %v295, %v294
    %v306 = vpack.c.b16 %v297, %v296
    %v307 = vpack.c.b16 %v299, %v298
    %316 = vmatpush.bf16.msra.mxu0 %v307
    %317 = vmatpush.bf16.msra.mxu0 %v306
    %318 = vmatpush.bf16.msra.mxu0 %v305
    %319 = vmatpush.bf16.msra.mxu0 %v304
    %320 = vmatpush.bf16.msra.mxu0 %v303
    %321 = vmatpush.bf16.msra.mxu0 %v302
    %322 = vmatpush.bf16.msra.mxu0 %v301
    %323 = vmatpush.bf16.msra.mxu0 %v300
    %324 = vmatmul.bf16.gmra.mxu0 %v247
    %v325 = vpop.f32.mrf.mxu0
    %v326 = vadd.f32 %v266, %v325
    %v327 = vpop.f32.mrf.mxu0
    %v328 = vadd.f32 %v266, %v327
    %329 = vdwg.mxu0
    %v330 = vmax.f32 %v326, 0.0
    %v331 = vmax.f32 %v328, 0.0
    %v332 = vpack.c.bf16 %v331, %v330
    %v333 = vld [vmem:[#allocation11] sm:$0xf]
    %v334 = vld [vmem:[#allocation11 + $0x4] sm:$0xf]
    %v335 = vld [vmem:[#allocation11 + $0x8] sm:$0xf]
    %v336 = vld [vmem:[#allocation11 + $0xc] sm:$0xf]
    %v337 = vld [vmem:[#allocation11 + $0x10] sm:$0xf]
    %v338 = vld [vmem:[#allocation11 + $0x14] sm:$0xf]
    %v339 = vld [vmem:[#allocation11 + $0x18] sm:$0xf]
    %v340 = vld [vmem:[#allocation11 + $0x1c] sm:$0xf]
    %v341 = vld [vmem:[#allocation11 + $0x20] sm:$0xf]
    %v342 = vld [vmem:[#allocation11 + $0x24] sm:$0xf]
    %v343 = vld [vmem:[#allocation11 + $0x28] sm:$0xf]
    %v344 = vld [vmem:[#allocation11 + $0x2c] sm:$0xf]
    %v345 = vld [vmem:[#allocation11 + $0x30] sm:$0xf]
    %v346 = vld [vmem:[#allocation11 + $0x34] sm:$0xf]
    %v347 = vld [vmem:[#allocation11 + $0x38] sm:$0xf]
    %v348 = vld [vmem:[#allocation11 + $0x3c] sm:$0xf]
    %v349 = vld [vmem:[%s8] sm:$0x1]
    %v351 = vperm.slane %v349, 0
    %v369 = vunpack.c.l.b16 %v333
    %v370 = vunpack.c.l.b16 %v334
    %v371 = vunpack.c.l.b16 %v335
    %v372 = vunpack.c.l.b16 %v336
    %v373 = vunpack.c.l.b16 %v337
    %v374 = vunpack.c.l.b16 %v338
    %v375 = vunpack.c.l.b16 %v339
    %v376 = vunpack.c.l.b16 %v340
    %v377 = vunpack.c.l.b16 %v341
    %v378 = vunpack.c.l.b16 %v342
    %v379 = vunpack.c.l.b16 %v343
    %v380 = vunpack.c.l.b16 %v344
    %v381 = vunpack.c.l.b16 %v345
    %v382 = vunpack.c.l.b16 %v346
    %v383 = vunpack.c.l.b16 %v347
    %v384 = vunpack.c.l.b16 %v348
    %v385 = vpack.c.b16 %v370, %v369
    %v386 = vpack.c.b16 %v372, %v371
    %v387 = vpack.c.b16 %v374, %v373
    %v388 = vpack.c.b16 %v376, %v375
    %v389 = vpack.c.b16 %v378, %v377
    %v390 = vpack.c.b16 %v380, %v379
    %v391 = vpack.c.b16 %v382, %v381
    %v392 = vpack.c.b16 %v384, %v383
    %401 = vmatpush.bf16.msra.mxu0 %v392
    %402 = vmatpush.bf16.msra.mxu0 %v391
    %403 = vmatpush.bf16.msra.mxu0 %v390
    %404 = vmatpush.bf16.msra.mxu0 %v389
    %405 = vmatpush.bf16.msra.mxu0 %v388
    %406 = vmatpush.bf16.msra.mxu0 %v387
    %407 = vmatpush.bf16.msra.mxu0 %v386
    %408 = vmatpush.bf16.msra.mxu0 %v385
    %409 = vmatmul.bf16.gmra.mxu0 %v332
    %v410 = vpop.f32.mrf.mxu0
    %v411 = vadd.f32 %v351, %v410
    %v412 = vpop.f32.mrf.mxu0
    %v413 = vadd.f32 %v351, %v412
    %414 = vdwg.mxu0
    %v415 = vmax.f32 %v411, 0.0
    %v416 = vmax.f32 %v413, 0.0
    %v417 = vpack.c.bf16 %v416, %v415
    %v418 = vld [vmem:[%s9] sm:$0xf]
    %419 = vmatpush.bf16.xpose.msra.mxu0 0
    %420 = vmatpush.bf16.xpose.msra.mxu0 0
    %421 = vmatpush.bf16.xpose.msra.mxu0 0
    %422 = vmatpush.bf16.xpose.msra.mxu0 0
    %423 = vmatpush.bf16.xpose.msra.mxu0 0
    %424 = vmatpush.bf16.xpose.msra.mxu0 0
    %425 = vmatpush.bf16.xpose.msra.mxu0 0
    %426 = vmatpush.bf16.xpose.msra.mxu0 %v417
    %427 = vmatmul.bf16.gmra.mxu0 %v418
    %v428 = vpop.f32.mrf.mxu0
    %v429 = vadd.f32 0.0, %v428
    %v430 = vpop.f32.mrf.mxu0
    %431 = vdwg.mxu0
    %s432 = sld [smem:[#allocation2]]
    %v433 = vstv %s432
    %v434 = vadd.f32 %v429, %v433
    %v435 = vxor.u32 %v434, 2147483648
    %v436 = vmul.f32 %v435, 1.442695
    %v437 = vpow.pop %v436
    %v438 = vadd.f32 %v437, 1.0
    %v439 = vrcp.pop %v438
    %v440 = vmul.f32 %v438, %v439
    %v441 = vsub.f32 1.0, %v440
    %v442 = vmul.f32 %v439, %v441
    %v443 = vadd.f32 %v439, %v442
    %vm444 = vweird.f32 %v438
    %vm445 = vweird.f32 %v439
    %vm446 = vmor %vm444, %vm445
    %v447 = vsel %vm446, %v439, %v443
    %v448 = vand.u32 2147483647, %v438
    %vm449 = vcmp.eq.f32.partialorder %v448, 8.507059e+37
    %v450 = vand.u32 %v438, 2147483648
    %v451 = vor.u32 1.1754944e-38, %v450
    %v452 = vsel %vm449, %v451, %v447
    %v453 = vmul.f32 1.0, %v452
    %vm454 = vcmask 122880
    %455 = vst.msk [vmem:[#allocation12] sm:$0x1] %vm454, %v453
    // Predicated region
    $region66: #{tpu_custom_call.1} parent=1 // pred_check
      _
    $region67: #{tpu_custom_call.1} parent=1 // pred_check_branch
      %457 = sbr.rel (0) target = $region69
    $region68: #{tpu_custom_call.1} parent=1 // pred_region
      %459 = vsyncadd [#allocation5], 0
      %s461 = sshll.u32 [#allocation12], 4
      %s462 = int_to_ptr.vmem [resolvable:$true] %s461
      %s463 = sshll.u32 %s11, 4
      %s464 = int_to_ptr.hbm [resolvable:$true] %s463
      %466 = dma.vmem_to_hbm [thread:$0]  %s462, 16, %s464, [#allocation5]
    $region69: #{tpu_custom_call.1} parent=1 // pred_fallthru
      _
    // Predicated region
    $region70: #{tpu_custom_call.1} parent=1 // pred_check
      _
    $region71: #{tpu_custom_call.1} parent=1 // pred_check_branch
      %468 = sbr.rel (0) target = $region73
    $region72: #{tpu_custom_call.1} parent=1 // pred_region
      %470 = dma.done [#allocation5], 16
    $region73: #{tpu_custom_call.1} parent=1 // pred_fallthru
      _
    %471 = vsyncpa [#allocation4], 1
    %472 = vsyncpa [#allocation7], 1
    %473 = vsyncpa [#allocation10], 1
    %474 = vsyncpa [#allocation5], 1

</llo_original>
